<compile_context>
chip_gen: v5e
topology: v5e:2x2
jax: 0.10.0
libtpu: 0.0.40
codegen_flags: <defaults>
</compile_context>

<pallas_src>
import jax
import jax.numpy as jnp
from jax.experimental import pallas as pl
from jax.experimental.pallas import tpu as pltpu


# ----------------------------- activation registry ------------------------------

_ACTS = {
    None: None,
    "relu": lambda h: jnp.maximum(h, 0.0),
    "silu": jax.nn.silu,
    "gelu": jax.nn.gelu,
    "tanh": jnp.tanh,
}


def _round_up(x, n):
    return ((x + n - 1) // n) * n


# ----------------------------- fused MLP kernel ------------------------------

def _make_mlp_kernel(num_layers, act_name):
    """Kernel body: x_tile -> L fused (matmul + bias [+ act]) -> out_tile."""
    act = _ACTS[act_name]

    def kernel(x_ref, *refs):
        # refs = (w1, b1, w2, b2, ..., wL, bL, o_ref)
        o_ref = refs[-1]
        wb = refs[:-1]
        h = x_ref[...].astype(jnp.float32)
        for l in range(num_layers):
            w = wb[2 * l][...]
            b = wb[2 * l + 1][...]
            h = jnp.dot(h, w, preferred_element_type=jnp.float32) + b
            if act is not None and l < num_layers - 1:
                h = act(h)
        o_ref[...] = h.astype(o_ref.dtype)

    return kernel


def mlp_forward(x, params, act=None, tile_m=512):
    """Fused MLP forward pass.

    x:      [M, d_in] float32
    params: list of (w [d_i, d_{i+1}], b [1, d_{i+1}]) per Linear layer
    act:    None | "relu" | "silu" | "gelu" | "tanh"  (applied to all but last layer)
    """
    num_layers = len(params)
    d_in = params[0][0].shape[0]
    d_out = params[-1][0].shape[1]
    assert x.ndim == 2 and x.shape[1] == d_in

    # --- lane-dense output: pad last layer's out-dim to a multiple of 128 so the
    #     kernel's output stores are full (unmasked) vst's.  Sliced away below.
    d_out_pad = _round_up(d_out, 128)
    params = list(params)
    if d_out_pad != d_out:
        w_last, b_last = params[-1]
        w_last = jnp.pad(w_last, ((0, 0), (0, d_out_pad - d_out)))
        b_last = jnp.pad(b_last, ((0, 0), (0, d_out_pad - d_out)))
        params[-1] = (w_last, b_last)

    # --- row tiling (multiple of 8 sublanes; clamp so tiny batches don't over-pad)
    m = x.shape[0]
    m_rounded8 = max(8, _round_up(m, 8))
    tile_m = max(8, (min(tile_m, m_rounded8) // 8) * 8)

    # --- VMEM budget: shrink tile_m if the fused footprint would not fit, and pass
    #     an explicit vmem_limit (clamped for v7x's 64 MiB physical VMEM).
    all_dims = [d_in] + [w.shape[1] for (w, _) in params]
    weight_bytes = sum(w.size + b.size for (w, b) in params) * 4
    vmem_cap = 56 * 1024 * 1024  # stay under v7x physical 64 MiB with headroom

    def footprint(tm):
        # double-buffered in/out tiles + resident weights (x2 safety) + live hidden
        io = 2 * tm * (d_in + d_out_pad) * 4
        hidden = 2 * tm * max(all_dims) * 4
        return io + 2 * weight_bytes + hidden + (4 << 20)

    while tile_m > 8 and footprint(tile_m) > vmem_cap:
        tile_m = max(8, (tile_m // 2 // 8) * 8)
    vmem_limit = int(min(max(footprint(tile_m), 16 << 20), 64 << 20))

    m_pad = _round_up(m, tile_m)
    if m_pad != m:
        x = jnp.pad(x, ((0, m_pad - m), (0, 0)))
    grid = (m_pad // tile_m,)

    # Activations: row-tiled.  Weights/biases: full blocks, resident across grid steps.
    in_specs = [pl.BlockSpec((tile_m, d_in), lambda i: (i, 0))]
    args = [x]
    for (w, b) in params:
        in_specs.append(pl.BlockSpec(w.shape, lambda i: (0, 0)))
        in_specs.append(pl.BlockSpec(b.shape, lambda i: (0, 0)))
        args.append(w)
        args.append(b)

    out = pl.pallas_call(
        _make_mlp_kernel(num_layers, act),
        out_shape=jax.ShapeDtypeStruct((m_pad, d_out_pad), x.dtype),
        grid=grid,
        in_specs=in_specs,
        out_specs=pl.BlockSpec((tile_m, d_out_pad), lambda i: (i, 0)),
        compiler_params=pltpu.CompilerParams(
            dimension_semantics=("parallel",),     # megacore: split rows across TCs
            vmem_limit_bytes=vmem_limit,
        ),
    )(*args)

    return out[:m, :d_out]


# ----------------------------- parameters ------------------------------

def _init_linear(key, d_in, d_out):
    # Matches PyTorch nn.Linear default init: U(-1/sqrt(fan_in), +1/sqrt(fan_in)).
    kw, kb = jax.random.split(key)
    bound = 1.0 / jnp.sqrt(float(d_in))
    w = jax.random.uniform(kw, (d_in, d_out), jnp.float32, -bound, bound)  # [in, out]
    b = jax.random.uniform(kb, (1, d_out), jnp.float32, -bound, bound)
    return w, b


def init_mlp(key, hidden_size_list):
    keys = jax.random.split(key, len(hidden_size_list) - 1)
    return [
        _init_linear(keys[i], hidden_size_list[i], hidden_size_list[i + 1])
        for i in range(len(hidden_size_list) - 1)
    ]


# ----------------------------- pure-JAX reference ------------------------------

def _ref_mlp(x, params, act=None):
    act_fn = _ACTS[act]
    h = x
    for l, (w, b) in enumerate(params):
        h = h @ w + b
        if act_fn is not None and l < len(params) - 1:
            h = act_fn(h)
    return h


# ----------------------------- main ------------------------------

if __name__ == "__main__":
    # MLP([64, 128, 128, 10], act=ReLU)  — like the docstring example.
    hidden_size_list = [64, 128, 128, 10]
    act = "relu"
    batch = 200  # not a tile multiple -> exercises padding + multi-step grid

    key = jax.random.PRNGKey(0)
    kp, kx = jax.random.split(key)
    params = init_mlp(kp, hidden_size_list)
    x = jax.random.normal(kx, (batch, hidden_size_list[0]), jnp.float32)

    # tile_m=64 at this toy batch => grid of 4 steps (exercises the pipelined grid);
    # at real batch sizes leave the default tile_m=512.
    out = mlp_forward(x, params, act=act, tile_m=64)
    jax.block_until_ready(out)

    ref = _ref_mlp(x, params, act=act)
    assert out.shape == (batch, hidden_size_list[-1])
    assert jnp.allclose(out, ref, atol=1e-4, rtol=1e-4), float(jnp.max(jnp.abs(out - ref)))

    print("KERNEL_OK")
</pallas_src>

<mosaic_0001>
module attributes {stable_mosaic.version = 11 : i64} {
  func.func @kernel(%arg0: i32, %arg1: memref<64x64xf32, #tpu.memory_space<vmem>>, %arg2: memref<64x128xf32, #tpu.memory_space<vmem>>, %arg3: memref<1x128xf32, #tpu.memory_space<vmem>>, %arg4: memref<128x128xf32, #tpu.memory_space<vmem>>, %arg5: memref<1x128xf32, #tpu.memory_space<vmem>>, %arg6: memref<128x128xf32, #tpu.memory_space<vmem>>, %arg7: memref<1x128xf32, #tpu.memory_space<vmem>>, %arg8: memref<64x128xf32, #tpu.memory_space<vmem>>) attributes {dimension_semantics = [#tpu.dimension_semantics<parallel>], iteration_bounds = array<i64: 4>, scalar_prefetch = 0 : i64, scratch_operands = 0 : i64, tpu.core_type = #tpu.core_type<tc>, window_params = [{transform_indices = @transform_0, window_bounds = array<i64: 64, 64>}, {pipeline_mode = #tpu.pipeline_mode<synchronous>, transform_indices = @transform_1, window_bounds = array<i64: 64, 128>}, {pipeline_mode = #tpu.pipeline_mode<synchronous>, transform_indices = @transform_2, window_bounds = array<i64: 1, 128>}, {pipeline_mode = #tpu.pipeline_mode<synchronous>, transform_indices = @transform_3, window_bounds = array<i64: 128, 128>}, {pipeline_mode = #tpu.pipeline_mode<synchronous>, transform_indices = @transform_4, window_bounds = array<i64: 1, 128>}, {pipeline_mode = #tpu.pipeline_mode<synchronous>, transform_indices = @transform_5, window_bounds = array<i64: 128, 128>}, {pipeline_mode = #tpu.pipeline_mode<synchronous>, transform_indices = @transform_6, window_bounds = array<i64: 1, 128>}, {transform_indices = @transform_7, window_bounds = array<i64: 64, 128>}]} {
    %c0 = arith.constant 0 : index
    %c0_0 = arith.constant 0 : index
    %0 = vector.load %arg1[%c0, %c0_0] : memref<64x64xf32, #tpu.memory_space<vmem>>, vector<64x64xf32>
    %c0_1 = arith.constant 0 : index
    %c0_2 = arith.constant 0 : index
    %1 = vector.load %arg2[%c0_1, %c0_2] : memref<64x128xf32, #tpu.memory_space<vmem>>, vector<64x128xf32>
    %c0_3 = arith.constant 0 : index
    %c0_4 = arith.constant 0 : index
    %2 = vector.load %arg3[%c0_3, %c0_4] : memref<1x128xf32, #tpu.memory_space<vmem>>, vector<1x128xf32>
    %cst = arith.constant dense<0.000000e+00> : vector<64x128xf32>
    %3 = tpu.matmul %0, %1, %cst {dimension_numbers = #tpu.dot_dimension_numbers<[1], [0], [0], [1], [0, 0, 1, 1], [], []>} : vector<64x64xf32>, vector<64x128xf32>, vector<64x128xf32> -> vector<64x128xf32>
    %4 = vector.broadcast %2 : vector<1x128xf32> to vector<64x128xf32>
    %5 = arith.addf %3, %4 : vector<64x128xf32>
    %cst_5 = arith.constant 0.000000e+00 : f32
    %6 = vector.broadcast %cst_5 : f32 to vector<64x128xf32>
    %7 = arith.maximumf %5, %6 : vector<64x128xf32>
    %c0_6 = arith.constant 0 : index
    %c0_7 = arith.constant 0 : index
    %8 = vector.load %arg4[%c0_6, %c0_7] : memref<128x128xf32, #tpu.memory_space<vmem>>, vector<128x128xf32>
    %c0_8 = arith.constant 0 : index
    %c0_9 = arith.constant 0 : index
    %9 = vector.load %arg5[%c0_8, %c0_9] : memref<1x128xf32, #tpu.memory_space<vmem>>, vector<1x128xf32>
    %cst_10 = arith.constant dense<0.000000e+00> : vector<64x128xf32>
    %10 = tpu.matmul %7, %8, %cst_10 {dimension_numbers = #tpu.dot_dimension_numbers<[1], [0], [0], [1], [0, 0, 1, 1], [], []>} : vector<64x128xf32>, vector<128x128xf32>, vector<64x128xf32> -> vector<64x128xf32>
    %11 = vector.broadcast %9 : vector<1x128xf32> to vector<64x128xf32>
    %12 = arith.addf %10, %11 : vector<64x128xf32>
    %cst_11 = arith.constant 0.000000e+00 : f32
    %13 = vector.broadcast %cst_11 : f32 to vector<64x128xf32>
    %14 = arith.maximumf %12, %13 : vector<64x128xf32>
    %c0_12 = arith.constant 0 : index
    %c0_13 = arith.constant 0 : index
    %15 = vector.load %arg6[%c0_12, %c0_13] : memref<128x128xf32, #tpu.memory_space<vmem>>, vector<128x128xf32>
    %c0_14 = arith.constant 0 : index
    %c0_15 = arith.constant 0 : index
    %16 = vector.load %arg7[%c0_14, %c0_15] : memref<1x128xf32, #tpu.memory_space<vmem>>, vector<1x128xf32>
    %cst_16 = arith.constant dense<0.000000e+00> : vector<64x128xf32>
    %17 = tpu.matmul %14, %15, %cst_16 {dimension_numbers = #tpu.dot_dimension_numbers<[1], [0], [0], [1], [0, 0, 1, 1], [], []>} : vector<64x128xf32>, vector<128x128xf32>, vector<64x128xf32> -> vector<64x128xf32>
    %18 = vector.broadcast %16 : vector<1x128xf32> to vector<64x128xf32>
    %19 = arith.addf %17, %18 : vector<64x128xf32>
    %c0_17 = arith.constant 0 : index
    %c0_18 = arith.constant 0 : index
    %20 = vector.load %arg8[%c0_17, %c0_18] : memref<64x128xf32, #tpu.memory_space<vmem>>, vector<64x128xf32>
    tpu.vector_store %arg8[%c0_17, %c0_18], %19 {strides = array<i32>} : memref<64x128xf32, #tpu.memory_space<vmem>>, vector<64x128xf32>,
    return
  }
  func.func @transform_0(%arg0: i32) -> (i32, i32) {
    %c0_i32 = arith.constant 0 : i32
    %c0_i32_0 = arith.constant 0 : i32
    return %arg0, %c0_i32 : i32, i32
  }
  func.func @transform_1(%arg0: i32) -> (i32, i32) {
    %c0_i32 = arith.constant 0 : i32
    %c0_i32_0 = arith.constant 0 : i32
    %c0_i32_1 = arith.constant 0 : i32
    return %c0_i32, %c0_i32_0 : i32, i32
  }
  func.func @transform_2(%arg0: i32) -> (i32, i32) {
    %c0_i32 = arith.constant 0 : i32
    %c0_i32_0 = arith.constant 0 : i32
    %c0_i32_1 = arith.constant 0 : i32
    return %c0_i32, %c0_i32_0 : i32, i32
  }
  func.func @transform_3(%arg0: i32) -> (i32, i32) {
    %c0_i32 = arith.constant 0 : i32
    %c0_i32_0 = arith.constant 0 : i32
    %c0_i32_1 = arith.constant 0 : i32
    return %c0_i32, %c0_i32_0 : i32, i32
  }
  func.func @transform_4(%arg0: i32) -> (i32, i32) {
    %c0_i32 = arith.constant 0 : i32
    %c0_i32_0 = arith.constant 0 : i32
    %c0_i32_1 = arith.constant 0 : i32
    return %c0_i32, %c0_i32_0 : i32, i32
  }
  func.func @transform_5(%arg0: i32) -> (i32, i32) {
    %c0_i32 = arith.constant 0 : i32
    %c0_i32_0 = arith.constant 0 : i32
    %c0_i32_1 = arith.constant 0 : i32
    return %c0_i32, %c0_i32_0 : i32, i32
  }
  func.func @transform_6(%arg0: i32) -> (i32, i32) {
    %c0_i32 = arith.constant 0 : i32
    %c0_i32_0 = arith.constant 0 : i32
    %c0_i32_1 = arith.constant 0 : i32
    return %c0_i32, %c0_i32_0 : i32, i32
  }
  func.func @transform_7(%arg0: i32) -> (i32, i32) {
    %c0_i32 = arith.constant 0 : i32
    %c0_i32_0 = arith.constant 0 : i32
    return %arg0, %c0_i32 : i32, i32
  }
}

</mosaic_0001>

<llo_original>
// kernel: tpu_custom_call.1
$region0: #{tpu_custom_call.1}
  #allocation0 [shape = 'u32[]', space=smem, size = 0x4, offset = 0x4, fixed_abs, tag = 'smem constant byte address 0x4 - core index']
  #allocation1 [shape = 'u32[72,128]{1,0:T(1,128)}', space=vmem, size = 0x9000, scoped, tag = 'internal scratch']
  %s0 = inlined_call_operand.vmem [shape: f32[256,64], index: 0, kind: input, shape index: {}]
  %s1 = inlined_call_operand.vmem [shape: f32[64,128], index: 1, kind: input, shape index: {}]
  %s2 = inlined_call_operand.vmem [shape: f32[1,128], index: 2, kind: input, shape index: {}]
  %s3 = inlined_call_operand.vmem [shape: f32[128,128], index: 3, kind: input, shape index: {}]
  %s4 = inlined_call_operand.vmem [shape: f32[1,128], index: 4, kind: input, shape index: {}]
  %s5 = inlined_call_operand.vmem [shape: f32[128,128], index: 5, kind: input, shape index: {}]
  %s6 = inlined_call_operand.vmem [shape: f32[1,128], index: 6, kind: input, shape index: {}]
  %s7 = inlined_call_operand.hbm [shape: f32[256,128], index: 7, kind: output, shape index: {}]
  %s8 = sld [smem:[#allocation0]]
  $region61: #{tpu_custom_call.1} parent=0
    _
  %s10 = ssub.s32 1, %s8
  %s11 = scalar_select 0, %s10, %s8
  $region1: #{tpu_custom_call.1} parent=0
    #allocation2 [shape = 'u8[65536]{0}', space=vmem, size = 0x10000, scoped, tag = 'output window, operand 0']
    #allocation3 [shape = 's32[2]{0}', space=sflag, size = 0x8, scoped, tag = 'scoped memory for tpu_custom_call.1']
    %12 = vsyncpa [#allocation3], 0
    %s13 = scalar_lea.sflag [#allocation3], 1
    %14 = vsyncpa %s13, 0
    loop: start=0, step=1, limit=6
    $region2: #{tpu_custom_call.1} parent=1 // loop_pre_header
      _
    $region3: #{tpu_custom_call.1} parent=1 // loop_header
      %s16 = sphi 0, %s20
      %p17 = scmp.ge.s32.totalorder %s16, 6
      %s26 = sphi 0, %s28
      %s29 = sphi 0, %s26
      %s30 = sphi 0, %s29
      %s46 = sphi 0, %s30
      %s50 = sphi 0, %s50
      %s52 = sphi 0, %s50
      %s53 = sphi 0, %s52
      %s67 = sphi 0, %s53
      %s71 = sphi 0, %s71
      %s73 = sphi 0, %s71
      %s74 = sphi 0, %s73
      %s88 = sphi 0, %s74
      %s92 = sphi 0, %s92
      %s94 = sphi 0, %s92
      %s95 = sphi 0, %s94
      %s109 = sphi 0, %s95
      %s113 = sphi 0, %s113
      %s115 = sphi 0, %s113
      %s116 = sphi 0, %s115
      %s130 = sphi 0, %s116
      %s134 = sphi 0, %s134
      %s136 = sphi 0, %s134
      %s137 = sphi 0, %s136
      %s151 = sphi 0, %s137
      %s155 = sphi 0, %s155
      %s157 = sphi 0, %s155
      %s158 = sphi 0, %s157
      %s172 = sphi 0, %s158
      %s178 = sphi 0, %s180
      %s181 = sphi 0, %s178
      %s182 = sphi 0, %s181
      %s198 = sphi 0, %s182
    $region4: #{tpu_custom_call.1} parent=1 // loop_header_branch
      %19 = sbr.rel (%p17) target = $region8
    $region5: #{tpu_custom_call.1} parent=1 // loop_body
      %s21 = ssub.s32 %s16, 1
      %s22 = ssub.s32 %s16, 2
      %s23 = sadd.s32 %s16, 1
      %s24 = ssub.s32 %s16, %s23
      %p25 = scmp.eq.s32.totalorder %s24, 0
      %s27 = sadd.s32 %s26, 1
      %s28 = scalar_select %p25, %s26, %s27
      %p31 = pneg %p25
      %p32 = scmp.eq.s32.totalorder %s16, 3
      %p33 = por %p31, %p32
      %p34 = scmp.ne.s32.totalorder %s26, %s29
      %p35 = scmp.eq.s32.totalorder %s16, 0
      %p36 = por %p34, %p35
      %p37 = scmp.ne.s32.totalorder %s26, %s29
      %p38 = scmp.eq.s32.totalorder %s21, 3
      %p39 = por %p37, %p38
      %p40 = scmp.ne.s32.totalorder %s29, %s30
      %p41 = scmp.eq.s32.totalorder %s21, 0
      %p42 = por %p40, %p41
      %p43 = scmp.ne.s32.totalorder %s29, %s30
      %p44 = scmp.eq.s32.totalorder %s22, 3
      %p45 = por %p43, %p44
      %p47 = scmp.ne.s32.totalorder %s30, %s46
      %p48 = scmp.eq.s32.totalorder %s22, 0
      %p49 = por %p47, %p48
      %s51 = sadd.s32 %s50, 1
      %p54 = scmp.eq.s32.totalorder %s16, 3
      %p55 = scmp.ne.s32.totalorder %s50, %s52
      %p56 = scmp.eq.s32.totalorder %s16, 0
      %p57 = por %p55, %p56
      %p58 = scmp.ne.s32.totalorder %s50, %s52
      %p59 = scmp.eq.s32.totalorder %s21, 3
      %p60 = por %p58, %p59
      %p61 = scmp.ne.s32.totalorder %s52, %s53
      %p62 = scmp.eq.s32.totalorder %s21, 0
      %p63 = por %p61, %p62
      %p64 = scmp.ne.s32.totalorder %s52, %s53
      %p65 = scmp.eq.s32.totalorder %s22, 3
      %p66 = por %p64, %p65
      %p68 = scmp.ne.s32.totalorder %s53, %s67
      %p69 = scmp.eq.s32.totalorder %s22, 0
      %p70 = por %p68, %p69
      %s72 = sadd.s32 %s71, 1
      %p75 = scmp.eq.s32.totalorder %s16, 3
      %p76 = scmp.ne.s32.totalorder %s71, %s73
      %p77 = scmp.eq.s32.totalorder %s16, 0
      %p78 = por %p76, %p77
      %p79 = scmp.ne.s32.totalorder %s71, %s73
      %p80 = scmp.eq.s32.totalorder %s21, 3
      %p81 = por %p79, %p80
      %p82 = scmp.ne.s32.totalorder %s73, %s74
      %p83 = scmp.eq.s32.totalorder %s21, 0
      %p84 = por %p82, %p83
      %p85 = scmp.ne.s32.totalorder %s73, %s74
      %p86 = scmp.eq.s32.totalorder %s22, 3
      %p87 = por %p85, %p86
      %p89 = scmp.ne.s32.totalorder %s74, %s88
      %p90 = scmp.eq.s32.totalorder %s22, 0
      %p91 = por %p89, %p90
      %s93 = sadd.s32 %s92, 1
      %p96 = scmp.eq.s32.totalorder %s16, 3
      %p97 = scmp.ne.s32.totalorder %s92, %s94
      %p98 = scmp.eq.s32.totalorder %s16, 0
      %p99 = por %p97, %p98
      %p100 = scmp.ne.s32.totalorder %s92, %s94
      %p101 = scmp.eq.s32.totalorder %s21, 3
      %p102 = por %p100, %p101
      %p103 = scmp.ne.s32.totalorder %s94, %s95
      %p104 = scmp.eq.s32.totalorder %s21, 0
      %p105 = por %p103, %p104
      %p106 = scmp.ne.s32.totalorder %s94, %s95
      %p107 = scmp.eq.s32.totalorder %s22, 3
      %p108 = por %p106, %p107
      %p110 = scmp.ne.s32.totalorder %s95, %s109
      %p111 = scmp.eq.s32.totalorder %s22, 0
      %p112 = por %p110, %p111
      %s114 = sadd.s32 %s113, 1
      %p117 = scmp.eq.s32.totalorder %s16, 3
      %p118 = scmp.ne.s32.totalorder %s113, %s115
      %p119 = scmp.eq.s32.totalorder %s16, 0
      %p120 = por %p118, %p119
      %p121 = scmp.ne.s32.totalorder %s113, %s115
      %p122 = scmp.eq.s32.totalorder %s21, 3
      %p123 = por %p121, %p122
      %p124 = scmp.ne.s32.totalorder %s115, %s116
      %p125 = scmp.eq.s32.totalorder %s21, 0
      %p126 = por %p124, %p125
      %p127 = scmp.ne.s32.totalorder %s115, %s116
      %p128 = scmp.eq.s32.totalorder %s22, 3
      %p129 = por %p127, %p128
      %p131 = scmp.ne.s32.totalorder %s116, %s130
      %p132 = scmp.eq.s32.totalorder %s22, 0
      %p133 = por %p131, %p132
      %s135 = sadd.s32 %s134, 1
      %p138 = scmp.eq.s32.totalorder %s16, 3
      %p139 = scmp.ne.s32.totalorder %s134, %s136
      %p140 = scmp.eq.s32.totalorder %s16, 0
      %p141 = por %p139, %p140
      %p142 = scmp.ne.s32.totalorder %s134, %s136
      %p143 = scmp.eq.s32.totalorder %s21, 3
      %p144 = por %p142, %p143
      %p145 = scmp.ne.s32.totalorder %s136, %s137
      %p146 = scmp.eq.s32.totalorder %s21, 0
      %p147 = por %p145, %p146
      %p148 = scmp.ne.s32.totalorder %s136, %s137
      %p149 = scmp.eq.s32.totalorder %s22, 3
      %p150 = por %p148, %p149
      %p152 = scmp.ne.s32.totalorder %s137, %s151
      %p153 = scmp.eq.s32.totalorder %s22, 0
      %p154 = por %p152, %p153
      %s156 = sadd.s32 %s155, 1
      %p159 = scmp.eq.s32.totalorder %s16, 3
      %p160 = scmp.ne.s32.totalorder %s155, %s157
      %p161 = scmp.eq.s32.totalorder %s16, 0
      %p162 = por %p160, %p161
      %p163 = scmp.ne.s32.totalorder %s155, %s157
      %p164 = scmp.eq.s32.totalorder %s21, 3
      %p165 = por %p163, %p164
      %p166 = scmp.ne.s32.totalorder %s157, %s158
      %p167 = scmp.eq.s32.totalorder %s21, 0
      %p168 = por %p166, %p167
      %p169 = scmp.ne.s32.totalorder %s157, %s158
      %p170 = scmp.eq.s32.totalorder %s22, 3
      %p171 = por %p169, %p170
      %p173 = scmp.ne.s32.totalorder %s158, %s172
      %p174 = scmp.eq.s32.totalorder %s22, 0
      %p175 = por %p173, %p174
      %s176 = ssub.s32 %s16, %s23
      %p177 = scmp.eq.s32.totalorder %s176, 0
      %s179 = sadd.s32 %s178, 1
      %s180 = scalar_select %p177, %s178, %s179
      %p183 = pneg %p177
      %p184 = scmp.eq.s32.totalorder %s16, 3
      %p185 = por %p183, %p184
      %p186 = scmp.ne.s32.totalorder %s178, %s181
      %p187 = scmp.eq.s32.totalorder %s16, 0
      %p188 = por %p186, %p187
      %p189 = scmp.ne.s32.totalorder %s178, %s181
      %p190 = scmp.eq.s32.totalorder %s21, 3
      %p191 = por %p189, %p190
      %p192 = scmp.ne.s32.totalorder %s181, %s182
      %p193 = scmp.eq.s32.totalorder %s21, 0
      %p194 = por %p192, %p193
      %p195 = scmp.ne.s32.totalorder %s181, %s182
      %p196 = scmp.eq.s32.totalorder %s22, 3
      %p197 = por %p195, %p196
      %p199 = scmp.ne.s32.totalorder %s182, %s198
      %p200 = scmp.eq.s32.totalorder %s22, 0
      %p201 = por %p199, %p200
      %p202 = scmp.le.s32.totalorder 1, %s16
      %p203 = scmp.lt.s32.totalorder %s16, 5
      %p204 = pnand %p202, %p203
      %p205 = pneg %p204
      // Predicated region
      $region9: #{tpu_custom_call.1} parent=5 // pred_check
        _
      $region10: #{tpu_custom_call.1} parent=5 // pred_check_branch
        %207 = sbr.rel (%p204) target = $region12
      $region11: #{tpu_custom_call.1} parent=5 // pred_region
        %s208 = ssub.s32 %s16, 1
        // Predicated region
        $region13: #{tpu_custom_call.1} parent=11 // pred_check
          %p209 = pneg %p63
        $region14: #{tpu_custom_call.1} parent=11 // pred_check_branch
          %211 = sbr.rel (%p209) target = $region16
        $region15: #{tpu_custom_call.1} parent=11 // pred_region
          _
        $region16: #{tpu_custom_call.1} parent=11 // pred_fallthru
          _
        // Predicated region
        $region17: #{tpu_custom_call.1} parent=11 // pred_check
          %p212 = pneg %p84
        $region18: #{tpu_custom_call.1} parent=11 // pred_check_branch
          %214 = sbr.rel (%p212) target = $region20
        $region19: #{tpu_custom_call.1} parent=11 // pred_region
          _
        $region20: #{tpu_custom_call.1} parent=11 // pred_fallthru
          _
        // Predicated region
        $region21: #{tpu_custom_call.1} parent=11 // pred_check
          %p215 = pneg %p105
        $region22: #{tpu_custom_call.1} parent=11 // pred_check_branch
          %217 = sbr.rel (%p215) target = $region24
        $region23: #{tpu_custom_call.1} parent=11 // pred_region
          _
        $region24: #{tpu_custom_call.1} parent=11 // pred_fallthru
          _
        // Predicated region
        $region25: #{tpu_custom_call.1} parent=11 // pred_check
          %p218 = pneg %p126
        $region26: #{tpu_custom_call.1} parent=11 // pred_check_branch
          %220 = sbr.rel (%p218) target = $region28
        $region27: #{tpu_custom_call.1} parent=11 // pred_region
          _
        $region28: #{tpu_custom_call.1} parent=11 // pred_fallthru
          _
        // Predicated region
        $region29: #{tpu_custom_call.1} parent=11 // pred_check
          %p221 = pneg %p147
        $region30: #{tpu_custom_call.1} parent=11 // pred_check_branch
          %223 = sbr.rel (%p221) target = $region32
        $region31: #{tpu_custom_call.1} parent=11 // pred_region
          _
        $region32: #{tpu_custom_call.1} parent=11 // pred_fallthru
          _
        // Predicated region
        $region33: #{tpu_custom_call.1} parent=11 // pred_check
          %p224 = pneg %p168
        $region34: #{tpu_custom_call.1} parent=11 // pred_check_branch
          %226 = sbr.rel (%p224) target = $region36
        $region35: #{tpu_custom_call.1} parent=11 // pred_region
          _
        $region36: #{tpu_custom_call.1} parent=11 // pred_fallthru
          _
      $region12: #{tpu_custom_call.1} parent=5 // pred_fallthru
        _
      %p227 = scmp.lt.s32.totalorder %s16, 4
      // Predicated region
      $region37: #{tpu_custom_call.1} parent=5 // pred_check
        %p228 = pneg %p227
      $region38: #{tpu_custom_call.1} parent=5 // pred_check_branch
        %230 = sbr.rel (%p228) target = $region40
      $region39: #{tpu_custom_call.1} parent=5 // pred_region
        // Predicated region
        $region41: #{tpu_custom_call.1} parent=39 // pred_check
          %p231 = pneg %p36
        $region42: #{tpu_custom_call.1} parent=39 // pred_check_branch
          %233 = sbr.rel (%p231) target = $region44
        $region43: #{tpu_custom_call.1} parent=39 // pred_region
          %s234 = smul.u32 8, %s16
          %p235 = scmp.lt.s32.totalorder %s234, 31
          %s236 = scalar_select %p235, %s234, 31
          %s237 = smul.addr %s236, 8
          %s238 = scalar_lea.vmem %s0, %s237
          %s239 = smul.u32 8, %s16
        $region44: #{tpu_custom_call.1} parent=39 // pred_fallthru
          _
      $region40: #{tpu_custom_call.1} parent=5 // pred_fallthru
        _
      %p240 = scmp.le.s32.totalorder 1, %s16
      %p241 = scmp.lt.s32.totalorder %s16, 5
      %p242 = pnand %p240, %p241
      %p243 = pneg %p242
      // Predicated region
      $region45: #{tpu_custom_call.1} parent=5 // pred_check
        _
      $region46: #{tpu_custom_call.1} parent=5 // pred_check_branch
        %245 = sbr.rel (%p242) target = $region48
      $region47: #{tpu_custom_call.1} parent=5 // pred_region
        %s246 = ssub.s32 %s16, 1
        %s247 = smul.u32 8, %s21
        %p248 = scmp.lt.s32.totalorder %s247, 31
        %s249 = scalar_select %p248, %s247, 31
        %s250 = smul.addr %s249, 8
        %s251 = scalar_lea.vmem %s0, %s250
        %p252 = pneg %p42
        %p253 = pneg %p39
        %p254 = pneg %p63
        %p255 = pneg %p60
        %p256 = pneg %p84
        %p257 = pneg %p81
        %p258 = pneg %p105
        %p259 = pneg %p102
        %p260 = pneg %p126
        %p261 = pneg %p123
        %p262 = pneg %p147
        %p263 = pneg %p144
        %p264 = pneg %p168
        %p265 = pneg %p165
        %p266 = pneg %p194
        %p267 = pneg %p191
        %s268 = sand.u32 %s181, 1
        %s269 = scalar_lea.sflag [#allocation3], %s268
        %s270 = sand.u32 %s181, 1
        %s271 = smul.addr %s270, 64
        %s272 = scalar_lea.vmem [#allocation2], %s271
        %s273 = smul.u32 8, %s21
        %p274 = scmp.lt.s32.totalorder %s273, 31
        %s275 = scalar_select %p274, %s273, 31
        %s276 = smul.addr %s275, 8
        %s277 = scalar_lea.vmem %s0, %s276
        %s278 = smul.u32 8, %s21
        %s279 = smul.u32 8, %s21
        %v280 = vld [vmem:[%s277] sm:$0xff]
        %v281 = vld [vmem:[%s277 + $0x8] sm:$0xff]
        %v282 = vld [vmem:[%s277 + $0x10] sm:$0xff]
        %v283 = vld [vmem:[%s277 + $0x18] sm:$0xff]
        %v284 = vld [vmem:[%s277 + $0x20] sm:$0xff]
        %v285 = vld [vmem:[%s277 + $0x28] sm:$0xff]
        %v286 = vld [vmem:[%s277 + $0x30] sm:$0xff]
        %v287 = vld [vmem:[%s277 + $0x38] sm:$0xff]
        %v288 = vld [vmem:[%s1] sm:$0xff]
        %v289 = vld [vmem:[%s1 + $0x8] sm:$0xff]
        %v290 = vld [vmem:[%s1 + $0x10] sm:$0xff]
        %v291 = vld [vmem:[%s1 + $0x18] sm:$0xff]
        %v292 = vld [vmem:[%s1 + $0x20] sm:$0xff]
        %v293 = vld [vmem:[%s1 + $0x28] sm:$0xff]
        %v294 = vld [vmem:[%s1 + $0x30] sm:$0xff]
        %v295 = vld [vmem:[%s1 + $0x38] sm:$0xff]
        %v296 = vld [vmem:[%s2] sm:$0x1]
        %v298 = vperm.slane %v296, 0
        %vm300 = vcmask 523264
        %v302 = vsel %vm300, %v280, 0
        %v305 = vsel %vm300, %v281, 0
        %v308 = vsel %vm300, %v282, 0
        %v311 = vsel %vm300, %v283, 0
        %v314 = vsel %vm300, %v284, 0
        %v317 = vsel %vm300, %v285, 0
        %v320 = vsel %vm300, %v286, 0
        %v323 = vsel %vm300, %v287, 0
        %325 = vmatpush.msra.mxu0 0.0
        %326 = vmatpush.msra.mxu0 0.0
        %327 = vmatpush.msra.mxu0 0.0
        %328 = vmatpush.msra.mxu0 0.0
        %329 = vmatpush.msra.mxu0 0.0
        %330 = vmatpush.msra.mxu0 0.0
        %331 = vmatpush.msra.mxu0 0.0
        %332 = vmatpush.msra.mxu0 0.0
        %333 = vmatpush.msra.mxu0 %v295
        %334 = vmatpush.msra.mxu0 %v294
        %335 = vmatpush.msra.mxu0 %v293
        %336 = vmatpush.msra.mxu0 %v292
        %337 = vmatpush.msra.mxu0 %v291
        %338 = vmatpush.msra.mxu0 %v290
        %339 = vmatpush.msra.mxu0 %v289
        %340 = vmatpush.msra.mxu0 %v288
        %341 = vmatmul.f32.gmra.mxu0 %v302
        %v342 = vpop.f32.mrf.mxu0
        %v343 = vadd.f32 %v298, %v342
        %344 = vmatmul.f32.gmra.mxu0 %v305
        %v345 = vpop.f32.mrf.mxu0
        %v346 = vadd.f32 %v298, %v345
        %347 = vmatmul.f32.gmra.mxu0 %v308
        %v348 = vpop.f32.mrf.mxu0
        %v349 = vadd.f32 %v298, %v348
        %350 = vmatmul.f32.gmra.mxu0 %v311
        %v351 = vpop.f32.mrf.mxu0
        %v352 = vadd.f32 %v298, %v351
        %353 = vmatmul.f32.gmra.mxu0 %v314
        %v354 = vpop.f32.mrf.mxu0
        %v355 = vadd.f32 %v298, %v354
        %356 = vmatmul.f32.gmra.mxu0 %v317
        %v357 = vpop.f32.mrf.mxu0
        %v358 = vadd.f32 %v298, %v357
        %359 = vmatmul.f32.gmra.mxu0 %v320
        %v360 = vpop.f32.mrf.mxu0
        %v361 = vadd.f32 %v298, %v360
        %362 = vmatmul.f32.gmra.mxu0 %v323
        %v363 = vpop.f32.mrf.mxu0
        %v364 = vadd.f32 %v298, %v363
        %365 = vdwg.mxu0
        %v366 = vmax.f32 %v343, 0.0
        %v367 = vmax.f32 %v346, 0.0
        %v368 = vmax.f32 %v349, 0.0
        %v369 = vmax.f32 %v352, 0.0
        %v370 = vmax.f32 %v355, 0.0
        %v371 = vmax.f32 %v358, 0.0
        %v372 = vmax.f32 %v361, 0.0
        %v373 = vmax.f32 %v364, 0.0
        %v374 = vld [vmem:[%s3] sm:$0xff]
        %v375 = vld [vmem:[%s3 + $0x8] sm:$0xff]
        %v376 = vld [vmem:[%s3 + $0x10] sm:$0xff]
        %v377 = vld [vmem:[%s3 + $0x18] sm:$0xff]
        %v378 = vld [vmem:[%s3 + $0x20] sm:$0xff]
        %v379 = vld [vmem:[%s3 + $0x28] sm:$0xff]
        %v380 = vld [vmem:[%s3 + $0x30] sm:$0xff]
        %v381 = vld [vmem:[%s3 + $0x38] sm:$0xff]
        %v382 = vld [vmem:[%s3 + $0x40] sm:$0xff]
        %v383 = vld [vmem:[%s3 + $0x48] sm:$0xff]
        %v384 = vld [vmem:[%s3 + $0x50] sm:$0xff]
        %v385 = vld [vmem:[%s3 + $0x58] sm:$0xff]
        %v386 = vld [vmem:[%s3 + $0x60] sm:$0xff]
        %v387 = vld [vmem:[%s3 + $0x68] sm:$0xff]
        %v388 = vld [vmem:[%s3 + $0x70] sm:$0xff]
        %v389 = vld [vmem:[%s3 + $0x78] sm:$0xff]
        %v390 = vld [vmem:[%s4] sm:$0x1]
        %v392 = vperm.slane %v390, 0
        %394 = vmatpush.msra.mxu0 %v389
        %395 = vmatpush.msra.mxu0 %v388
        %396 = vmatpush.msra.mxu0 %v387
        %397 = vmatpush.msra.mxu0 %v386
        %398 = vmatpush.msra.mxu0 %v385
        %399 = vmatpush.msra.mxu0 %v384
        %400 = vmatpush.msra.mxu0 %v383
        %401 = vmatpush.msra.mxu0 %v382
        %402 = vmatpush.msra.mxu0 %v381
        %403 = vmatpush.msra.mxu0 %v380
        %404 = vmatpush.msra.mxu0 %v379
        %405 = vmatpush.msra.mxu0 %v378
        %406 = vmatpush.msra.mxu0 %v377
        %407 = vmatpush.msra.mxu0 %v376
        %408 = vmatpush.msra.mxu0 %v375
        %409 = vmatpush.msra.mxu0 %v374
        %410 = vmatmul.f32.gmra.mxu0 %v366
        %v411 = vpop.f32.mrf.mxu0
        %v412 = vadd.f32 %v392, %v411
        %413 = vmatmul.f32.gmra.mxu0 %v367
        %v414 = vpop.f32.mrf.mxu0
        %v415 = vadd.f32 %v392, %v414
        %416 = vmatmul.f32.gmra.mxu0 %v368
        %v417 = vpop.f32.mrf.mxu0
        %v418 = vadd.f32 %v392, %v417
        %419 = vmatmul.f32.gmra.mxu0 %v369
        %v420 = vpop.f32.mrf.mxu0
        %v421 = vadd.f32 %v392, %v420
        %422 = vmatmul.f32.gmra.mxu0 %v370
        %v423 = vpop.f32.mrf.mxu0
        %v424 = vadd.f32 %v392, %v423
        %425 = vmatmul.f32.gmra.mxu0 %v371
        %v426 = vpop.f32.mrf.mxu0
        %v427 = vadd.f32 %v392, %v426
        %428 = vmatmul.f32.gmra.mxu0 %v372
        %v429 = vpop.f32.mrf.mxu0
        %v430 = vadd.f32 %v392, %v429
        %431 = vmatmul.f32.gmra.mxu0 %v373
        %v432 = vpop.f32.mrf.mxu0
        %v433 = vadd.f32 %v392, %v432
        %434 = vdwg.mxu0
        %v435 = vmax.f32 %v412, 0.0
        %v436 = vmax.f32 %v415, 0.0
        %v437 = vmax.f32 %v418, 0.0
        %v438 = vmax.f32 %v421, 0.0
        %v439 = vmax.f32 %v424, 0.0
        %v440 = vmax.f32 %v427, 0.0
        %v441 = vmax.f32 %v430, 0.0
        %v442 = vmax.f32 %v433, 0.0
        %v443 = vld [vmem:[%s5] sm:$0xff]
        %v444 = vld [vmem:[%s5 + $0x8] sm:$0xff]
        %v445 = vld [vmem:[%s5 + $0x10] sm:$0xff]
        %v446 = vld [vmem:[%s5 + $0x18] sm:$0xff]
        %v447 = vld [vmem:[%s5 + $0x20] sm:$0xff]
        %v448 = vld [vmem:[%s5 + $0x28] sm:$0xff]
        %v449 = vld [vmem:[%s5 + $0x30] sm:$0xff]
        %v450 = vld [vmem:[%s5 + $0x38] sm:$0xff]
        %v451 = vld [vmem:[%s5 + $0x40] sm:$0xff]
        %v452 = vld [vmem:[%s5 + $0x48] sm:$0xff]
        %v453 = vld [vmem:[%s5 + $0x50] sm:$0xff]
        %v454 = vld [vmem:[%s5 + $0x58] sm:$0xff]
        %v455 = vld [vmem:[%s5 + $0x60] sm:$0xff]
        %v456 = vld [vmem:[%s5 + $0x68] sm:$0xff]
        %v457 = vld [vmem:[%s5 + $0x70] sm:$0xff]
        %v458 = vld [vmem:[%s5 + $0x78] sm:$0xff]
        %v459 = vld [vmem:[%s6] sm:$0x1]
        %v461 = vperm.slane %v459, 0
        %463 = vmatpush.msra.mxu0 %v458
        %464 = vmatpush.msra.mxu0 %v457
        %465 = vmatpush.msra.mxu0 %v456
        %466 = vmatpush.msra.mxu0 %v455
        %467 = vmatpush.msra.mxu0 %v454
        %468 = vmatpush.msra.mxu0 %v453
        %469 = vmatpush.msra.mxu0 %v452
        %470 = vmatpush.msra.mxu0 %v451
        %471 = vmatpush.msra.mxu0 %v450
        %472 = vmatpush.msra.mxu0 %v449
        %473 = vmatpush.msra.mxu0 %v448
        %474 = vmatpush.msra.mxu0 %v447
        %475 = vmatpush.msra.mxu0 %v446
        %476 = vmatpush.msra.mxu0 %v445
        %477 = vmatpush.msra.mxu0 %v444
        %478 = vmatpush.msra.mxu0 %v443
        %479 = vmatmul.f32.gmra.mxu0 %v435
        %v480 = vpop.f32.mrf.mxu0
        %v481 = vadd.f32 %v461, %v480
        %482 = vmatmul.f32.gmra.mxu0 %v436
        %v483 = vpop.f32.mrf.mxu0
        %v484 = vadd.f32 %v461, %v483
        %485 = vmatmul.f32.gmra.mxu0 %v437
        %v486 = vpop.f32.mrf.mxu0
        %v487 = vadd.f32 %v461, %v486
        %488 = vmatmul.f32.gmra.mxu0 %v438
        %v489 = vpop.f32.mrf.mxu0
        %v490 = vadd.f32 %v461, %v489
        %491 = vmatmul.f32.gmra.mxu0 %v439
        %v492 = vpop.f32.mrf.mxu0
        %v493 = vadd.f32 %v461, %v492
        %494 = vmatmul.f32.gmra.mxu0 %v440
        %v495 = vpop.f32.mrf.mxu0
        %v496 = vadd.f32 %v461, %v495
        %497 = vmatmul.f32.gmra.mxu0 %v441
        %v498 = vpop.f32.mrf.mxu0
        %v499 = vadd.f32 %v461, %v498
        %500 = vmatmul.f32.gmra.mxu0 %v442
        %v501 = vpop.f32.mrf.mxu0
        %v502 = vadd.f32 %v461, %v501
        %503 = vdwg.mxu0
        %504 = vst [vmem:[%s272] sm:$0xff] %v481
        %505 = vst [vmem:[%s272 + $0x8] sm:$0xff] %v484
        %506 = vst [vmem:[%s272 + $0x10] sm:$0xff] %v487
        %507 = vst [vmem:[%s272 + $0x18] sm:$0xff] %v490
        %508 = vst [vmem:[%s272 + $0x20] sm:$0xff] %v493
        %509 = vst [vmem:[%s272 + $0x28] sm:$0xff] %v496
        %510 = vst [vmem:[%s272 + $0x30] sm:$0xff] %v499
        %511 = vst [vmem:[%s272 + $0x38] sm:$0xff] %v502
        %s512 = sand.u32 %s181, 1
        %s513 = scalar_lea.sflag [#allocation3], %s512
        %s514 = sand.u32 %s181, 1
        %s515 = smul.addr %s514, 64
        %s516 = scalar_lea.vmem [#allocation2], %s515
        // Predicated region
        $region49: #{tpu_custom_call.1} parent=47 // pred_check
          %p517 = pneg %p191
        $region50: #{tpu_custom_call.1} parent=47 // pred_check_branch
          %519 = sbr.rel (%p517) target = $region52
        $region51: #{tpu_custom_call.1} parent=47 // pred_region
          %s520 = smul.u32 8, %s21
          %522 = vsyncadd %s513, 0
          %s523 = smul.addr %s520, 8
          %s524 = scalar_lea.hbm %s7, %s523
          %s525 = sshll.u32 %s516, 4
          %s526 = int_to_ptr.vmem [resolvable:$true] %s525
          %s527 = sshll.u32 %s524, 4
          %s528 = int_to_ptr.hbm [resolvable:$true] %s527
          %533 = dma.vmem_to_hbm [thread:$0]  %s526, 1024, %s528, %s513, 128, 128, 8
        $region52: #{tpu_custom_call.1} parent=47 // pred_fallthru
          _
      $region48: #{tpu_custom_call.1} parent=5 // pred_fallthru
        _
      %p534 = scmp.le.s32.totalorder 2, %s16
      // Predicated region
      $region53: #{tpu_custom_call.1} parent=5 // pred_check
        %p535 = pneg %p534
      $region54: #{tpu_custom_call.1} parent=5 // pred_check_branch
        %537 = sbr.rel (%p535) target = $region56
      $region55: #{tpu_custom_call.1} parent=5 // pred_region
        %s538 = ssub.s32 %s16, 2
        // Predicated region
        $region57: #{tpu_custom_call.1} parent=55 // pred_check
          %p539 = pneg %p197
        $region58: #{tpu_custom_call.1} parent=55 // pred_check_branch
          %541 = sbr.rel (%p539) target = $region60
        $region59: #{tpu_custom_call.1} parent=55 // pred_region
          %s542 = sand.u32 %s182, 1
          %s543 = scalar_lea.sflag [#allocation3], %s542
          %s544 = sand.u32 %s182, 1
          %s545 = smul.addr %s544, 64
          %s546 = scalar_lea.vmem [#allocation2], %s545
          %548 = dma.done %s543, 1024
        $region60: #{tpu_custom_call.1} parent=55 // pred_fallthru
          _
      $region56: #{tpu_custom_call.1} parent=5 // pred_fallthru
        _
    $region6: #{tpu_custom_call.1} parent=1 // loop_footer
      %s20 = sadd.s32 1, %s16
    $region7: #{tpu_custom_call.1} parent=1 // loop_footer_branch
      %15 = sbr.rel target = $region3
    $region8: #{tpu_custom_call.1} parent=1 // loop_exit
      _
    %549 = vsyncpa [#allocation3], 1
    %s550 = scalar_lea.sflag [#allocation3], 1
    %551 = vsyncpa %s550, 1

</llo_original>
